<compile_context>
chip_gen: v5e
topology: v5e:2x2
jax: 0.10.0
libtpu: 0.0.40
codegen_flags: <defaults>
</compile_context>

<pallas_src>
import jax
import jax.numpy as jnp
from jax.experimental import pallas as pl
from jax.experimental.pallas import tpu as pltpu


def _round_up(x, m):
    return ((x + m - 1) // m) * m


def _gaussian_kernel1d(kernel_size: int, sigma):
    """Matches torchvision _get_gaussian_kernel1d; accepts traced sigma."""
    half = (kernel_size - 1) * 0.5
    xs = jnp.linspace(-half, half, kernel_size, dtype=jnp.float32)
    pdf = jnp.exp(-0.5 * jnp.square(xs / jnp.asarray(sigma, jnp.float32)))
    return pdf / jnp.sum(pdf)


def _reflect_band_basis(n: int, kernel_size: int):
    """0/1 basis matrices E_t of shape (k, n, n) with E_t[i, reflect(i+t)] = 1,
    where reflect is torch F.pad(mode='reflect') (no edge repeat)."""
    pad = kernel_size // 2
    basis = []
    for t in range(-pad, pad + 1):
        m = [[0.0] * n for _ in range(n)]
        for i in range(n):
            j = i + t
            if j < 0:
                j = -j
            elif j >= n:
                j = 2 * (n - 1) - j
            m[i][j] = 1.0
        basis.append(m)
    return jnp.asarray(basis, jnp.float32)          # (k, n, n)


def _vmem_capacity_bytes():
    try:
        return int(pltpu.get_tpu_info().vmem_capacity_bytes)
    except Exception:
        return 64 * 1024 * 1024  # conservative fallback (v7x per-core VMEM)


def _pick_planes_per_block(p_total: int, max_planes: int) -> int:
    # Largest divisor of p_total within the VMEM budget, while keeping the grid
    # >= 4 steps when possible (>= 2 steps per TensorCore on v7x) so the
    # "parallel" plane axis both shards across cores and pipelines within one.
    if p_total >= 4:
        min_steps = 4
    elif p_total >= 2:
        min_steps = 2
    else:
        min_steps = 1
    cap = max(1, min(max_planes, p_total // min_steps))
    best = 1
    for d in range(1, cap + 1):
        if p_total % d == 0:
            best = d
    return best


def _make_blur_kernel(P, H, W):
    def blur_kernel(x_ref, cx_ref, by_ref, o_ref):
        xin = x_ref[...].astype(jnp.float32)                      # (P, H, W)

        # Horizontal pass: a single MXU matmul against the (W, W) reflect band
        # matrix (boundary folded in; no padded scratch, no lane-misaligned
        # shifted loads).
        h = jnp.dot(xin.reshape(P * H, W), cx_ref[...],
                    preferred_element_type=jnp.float32)
        h = h.reshape(P, H, W)

        # Vertical pass: batched MXU matmul with the (H, H) reflect band matrix
        # (replaces the sublane-misaligned shifted slices + scratch round-trip).
        byb = jnp.broadcast_to(by_ref[...], (P, H, H))
        out = jnp.einsum('phj,pjw->phw', byb, h,
                         preferred_element_type=jnp.float32)

        if jnp.issubdtype(o_ref.dtype, jnp.integer):
            out = jnp.round(out)       # torchvision rounds integer images
        o_ref[...] = out.astype(o_ref.dtype)

    return blur_kernel


def gaussian_blur_pallas(img, kernel_size=(5, 5), sigma=1.0):
    """img: (..., H, W) array (e.g. NCHW). Returns blurred array, same shape/dtype."""
    kx, ky = int(kernel_size[0]), int(kernel_size[1])   # kx -> W axis, ky -> H axis
    assert kx % 2 == 1 and ky % 2 == 1 and kx > 0 and ky > 0
    pad_x, pad_y = kx // 2, ky // 2

    *lead, H, W = img.shape
    assert H > pad_y and W > pad_x, "reflect padding needs H > ky//2 and W > kx//2"
    p_total = 1
    for d in lead:
        p_total *= int(d)
    x = img.reshape(p_total, H, W)

    # 1D Gaussian taps (runtime data, not baked Python constants).
    taps_x = _gaussian_kernel1d(kx, sigma)
    taps_y = _gaussian_kernel1d(ky, sigma)

    # Reflect band matrices:  out = By @ x @ Cx
    #   Mx[out_w, in_w], My[out_h, in_h];  Cx = Mx^T so the horizontal pass is a
    #   plain right-multiplication contracting the input W axis.
    mx = jnp.einsum('t,tij->ij', taps_x, _reflect_band_basis(W, kx))
    my = jnp.einsum('t,tij->ij', taps_y, _reflect_band_basis(H, ky))
    cx = mx.T                                   # (W_in, W_out)
    by = my                                     # (H_out, H_in)

    # --- generation-aware, (8,128)-rounded VMEM budgeting --------------------
    f32 = 4
    itemsize = img.dtype.itemsize
    Hl, Wl = _round_up(H, 8), _round_up(W, 128)          # VMEM tile rounding

    vmem_cap = _vmem_capacity_bytes()
    vmem_limit = int(min(vmem_cap * 3 // 4, 96 * 1024 * 1024))

    per_plane = (2 * Hl * Wl * itemsize          # input block, double-buffered
                 + 2 * Hl * Wl * itemsize        # output block, double-buffered
                 + 4 * Hl * Wl * f32             # f32 temporaries (xin/h/out) + headroom
                 + H * _round_up(H, 128) * f32)  # per-plane slice of broadcast(By)
    fixed = 2 * f32 * (_round_up(W, 8) * _round_up(W, 128)
                       + _round_up(H, 8) * _round_up(H, 128))   # Cx / By blocks
    budget = int(vmem_limit * 0.85)
    max_planes = max(1, (budget - fixed) // per_plane)

    P = _pick_planes_per_block(p_total, int(max_planes))
    # NOTE: images so large that even P=1 exceeds the budget would need
    # row-strip + halo tiling over H; not required for the shapes used here.

    out = pl.pallas_call(
        _make_blur_kernel(P, H, W),
        out_shape=jax.ShapeDtypeStruct((p_total, H, W), img.dtype),
        grid_spec=pltpu.PrefetchScalarGridSpec(
            num_scalar_prefetch=0,
            grid=(p_total // P,),
            in_specs=[
                pl.BlockSpec((P, H, W), lambda p: (p, 0, 0)),
                pl.BlockSpec((W, W), lambda p: (0, 0)),
                pl.BlockSpec((H, H), lambda p: (0, 0)),
            ],
            out_specs=pl.BlockSpec((P, H, W), lambda p: (p, 0, 0)),
        ),
        compiler_params=pltpu.CompilerParams(
            dimension_semantics=("parallel",),
            vmem_limit_bytes=vmem_limit,
        ),
    )(x, cx, by)

    return out.reshape(img.shape)


def gaussian_blur_ref(img, kernel_size=(5, 5), sigma=1.0):
    """Pure-JAX reference (full 2D accumulation over a reflect-padded image)."""
    kx, ky = int(kernel_size[0]), int(kernel_size[1])
    k1d_x = _gaussian_kernel1d(kx, sigma)
    k1d_y = _gaussian_kernel1d(ky, sigma)
    w2d = jnp.outer(k1d_y, k1d_x)                                  # (ky, kx)
    *_, H, W = img.shape
    pad_x, pad_y = kx // 2, ky // 2
    pad = [(0, 0)] * (img.ndim - 2) + [(pad_y, pad_y), (pad_x, pad_x)]
    xp = jnp.pad(img.astype(jnp.float32), pad, mode="reflect")
    out = jnp.zeros(img.shape, jnp.float32)
    for dy in range(ky):
        for dx in range(kx):
            out = out + w2d[dy, dx] * xp[..., dy:dy + H, dx:dx + W]
    return out.astype(img.dtype)


if __name__ == "__main__":
    # Module config: GaussianBlur(kernel_size=5, sigma=(0.1, 2.0)).
    kernel_size = (5, 5)
    # TODO(synk): torchvision samples sigma ~ U(0.1, 2.0) with torch RNG per
    # forward call; reproduce that deterministically here with jax.random so
    # the kernel and the reference use the same value.
    skey, xkey = jax.random.split(jax.random.PRNGKey(0))
    sigma = float(jax.random.uniform(skey, (), minval=0.1, maxval=2.0))

    x = jax.random.uniform(xkey, (2, 4, 16, 16), dtype=jnp.float32)

    y = gaussian_blur_pallas(x, kernel_size, sigma)
    y = jax.block_until_ready(y)

    y_ref = gaussian_blur_ref(x, kernel_size, sigma)
    assert y.shape == x.shape and y.dtype == x.dtype
    assert jnp.allclose(y, y_ref, atol=1e-5, rtol=1e-5), "mismatch vs reference"

    print("KERNEL_OK")
</pallas_src>

<mosaic_0001>
module attributes {stable_mosaic.version = 11 : i64} {
  func.func @blur_kernel(%arg0: i32, %arg1: memref<2x16x16xf32, #tpu.memory_space<vmem>>, %arg2: memref<16x16xf32, #tpu.memory_space<vmem>>, %arg3: memref<16x16xf32, #tpu.memory_space<vmem>>, %arg4: memref<2x16x16xf32, #tpu.memory_space<vmem>>) attributes {dimension_semantics = [#tpu.dimension_semantics<parallel>], iteration_bounds = array<i64: 4>, scalar_prefetch = 0 : i64, scratch_operands = 0 : i64, tpu.core_type = #tpu.core_type<tc>, window_params = [{transform_indices = @transform_0, window_bounds = array<i64: 2, 16, 16>}, {pipeline_mode = #tpu.pipeline_mode<synchronous>, transform_indices = @transform_1, window_bounds = array<i64: 16, 16>}, {pipeline_mode = #tpu.pipeline_mode<synchronous>, transform_indices = @transform_2, window_bounds = array<i64: 16, 16>}, {transform_indices = @transform_3, window_bounds = array<i64: 2, 16, 16>}]} {
    %c0 = arith.constant 0 : index
    %c0_0 = arith.constant 0 : index
    %c0_1 = arith.constant 0 : index
    %0 = vector.load %arg1[%c0, %c0_0, %c0_1] : memref<2x16x16xf32, #tpu.memory_space<vmem>>, vector<2x16x16xf32>
    %1 = vector.shape_cast %0 : vector<2x16x16xf32> to vector<32x16xf32>
    %c0_2 = arith.constant 0 : index
    %c0_3 = arith.constant 0 : index
    %2 = vector.load %arg2[%c0_2, %c0_3] : memref<16x16xf32, #tpu.memory_space<vmem>>, vector<16x16xf32>
    %cst = arith.constant dense<0.000000e+00> : vector<32x16xf32>
    %3 = tpu.matmul %1, %2, %cst {dimension_numbers = #tpu.dot_dimension_numbers<[1], [0], [0], [1], [0, 0, 1, 1], [], []>} : vector<32x16xf32>, vector<16x16xf32>, vector<32x16xf32> -> vector<32x16xf32>
    %4 = vector.shape_cast %3 : vector<32x16xf32> to vector<2x16x16xf32>
    %c0_4 = arith.constant 0 : index
    %c0_5 = arith.constant 0 : index
    %5 = vector.load %arg3[%c0_4, %c0_5] : memref<16x16xf32, #tpu.memory_space<vmem>>, vector<16x16xf32>
    %6 = vector.shape_cast %5 : vector<16x16xf32> to vector<1x16x16xf32>
    %7 = vector.broadcast %6 : vector<1x16x16xf32> to vector<2x16x16xf32>
    "tpu.trace_start"() <{level = 10 : i32, message = "phj,pjw->phw"}> : () -> ()
    %cst_6 = arith.constant dense<0.000000e+00> : vector<2x16x16xf32>
    %8 = tpu.matmul %7, %4, %cst_6 {dimension_numbers = #tpu.dot_dimension_numbers<[2], [1], [1], [2], [0, 0, 0, 1, 1, 2], [0], [0]>} : vector<2x16x16xf32>, vector<2x16x16xf32>, vector<2x16x16xf32> -> vector<2x16x16xf32>
    "tpu.trace_stop"() : () -> ()
    %c0_7 = arith.constant 0 : index
    %c0_8 = arith.constant 0 : index
    %c0_9 = arith.constant 0 : index
    %9 = vector.load %arg4[%c0_7, %c0_8, %c0_9] : memref<2x16x16xf32, #tpu.memory_space<vmem>>, vector<2x16x16xf32>
    tpu.vector_store %arg4[%c0_7, %c0_8, %c0_9], %8 {strides = array<i32>} : memref<2x16x16xf32, #tpu.memory_space<vmem>>, vector<2x16x16xf32>,
    return
  }
  func.func @transform_0(%arg0: i32) -> (i32, i32, i32) {
    %c0_i32 = arith.constant 0 : i32
    %c0_i32_0 = arith.constant 0 : i32
    %c0_i32_1 = arith.constant 0 : i32
    return %arg0, %c0_i32, %c0_i32_0 : i32, i32, i32
  }
  func.func @transform_1(%arg0: i32) -> (i32, i32) {
    %c0_i32 = arith.constant 0 : i32
    %c0_i32_0 = arith.constant 0 : i32
    %c0_i32_1 = arith.constant 0 : i32
    return %c0_i32, %c0_i32_0 : i32, i32
  }
  func.func @transform_2(%arg0: i32) -> (i32, i32) {
    %c0_i32 = arith.constant 0 : i32
    %c0_i32_0 = arith.constant 0 : i32
    %c0_i32_1 = arith.constant 0 : i32
    return %c0_i32, %c0_i32_0 : i32, i32
  }
  func.func @transform_3(%arg0: i32) -> (i32, i32, i32) {
    %c0_i32 = arith.constant 0 : i32
    %c0_i32_0 = arith.constant 0 : i32
    %c0_i32_1 = arith.constant 0 : i32
    return %arg0, %c0_i32, %c0_i32_0 : i32, i32, i32
  }
}

</mosaic_0001>

<llo_original>
// kernel: tpu_custom_call.1
$region0: #{tpu_custom_call.1}
  #allocation0 [shape = 'u32[]', space=smem, size = 0x4, offset = 0x4, fixed_abs, tag = 'smem constant byte address 0x4 - core index']
  #allocation1 [shape = 'u32[72,128]{1,0:T(1,128)}', space=vmem, size = 0x9000, scoped, tag = 'internal scratch']
  %s0 = inlined_call_operand.hbm [shape: f32[8,16,16], index: 0, kind: input, shape index: {}]
  %s1 = inlined_call_operand.hbm [shape: f32[16,16], index: 1, kind: input, shape index: {}]
  %s2 = inlined_call_operand.hbm [shape: f32[16,16], index: 2, kind: input, shape index: {}]
  %s3 = inlined_call_operand.hbm [shape: f32[8,16,16], index: 3, kind: output, shape index: {}]
  %s4 = sld [smem:[#allocation0]]
  $region57: #{tpu_custom_call.1} parent=0
    _
  %s6 = ssub.s32 1, %s4
  %s7 = scalar_select 0, %s6, %s4
  $region1: #{tpu_custom_call.1} parent=0
    #allocation2 [shape = 'u8[32768]{0}', space=vmem, size = 0x8000, scoped, tag = 'input window, operand 0']
    #allocation3 [shape = 's32[2]{0}', space=sflag, size = 0x8, scoped, tag = 'scoped memory for tpu_custom_call.1']
    #allocation4 [shape = 's32[2]{0}', space=sflag, size = 0x8, scoped, tag = 'scoped memory for tpu_custom_call.1']
    #allocation5 [shape = 'u8[8192]{0}', space=vmem, size = 0x2000, scoped, tag = 'input window, operand 1, single buffered']
    #allocation6 [shape = 's32[1]{0}', space=sflag, size = 0x4, scoped, tag = 'scoped memory for tpu_custom_call.1']
    #allocation7 [shape = 'u8[8192]{0}', space=vmem, size = 0x2000, scoped, tag = 'input window, operand 2, single buffered']
    #allocation8 [shape = 'u8[32768]{0}', space=vmem, size = 0x8000, scoped, tag = 'output window, operand 0']
    %8 = vsyncpa [#allocation3], 0
    %s9 = scalar_lea.sflag [#allocation3], 1
    %10 = vsyncpa %s9, 0
    %11 = vsyncpa [#allocation6], 0
    %12 = vsyncpa [#allocation4], 0
    %s13 = scalar_lea.sflag [#allocation4], 1
    %14 = vsyncpa %s13, 0
    loop: start=0, step=1, limit=6
    $region2: #{tpu_custom_call.1} parent=1 // loop_pre_header
      _
    $region3: #{tpu_custom_call.1} parent=1 // loop_header
      %s16 = sphi 0, %s20
      %p17 = scmp.ge.s32.totalorder %s16, 6
      %s26 = sphi 0, %s28
      %s29 = sphi 0, %s26
      %s30 = sphi 0, %s29
      %s46 = sphi 0, %s30
      %s50 = sphi 0, %s50
      %s52 = sphi 0, %s50
      %s53 = sphi 0, %s52
      %s67 = sphi 0, %s53
      %s71 = sphi 0, %s71
      %s73 = sphi 0, %s71
      %s74 = sphi 0, %s73
      %s88 = sphi 0, %s74
      %s94 = sphi 0, %s96
      %s97 = sphi 0, %s94
      %s98 = sphi 0, %s97
      %s114 = sphi 0, %s98
    $region4: #{tpu_custom_call.1} parent=1 // loop_header_branch
      %19 = sbr.rel (%p17) target = $region8
    $region5: #{tpu_custom_call.1} parent=1 // loop_body
      %s21 = ssub.s32 %s16, 1
      %s22 = ssub.s32 %s16, 2
      %s23 = sadd.s32 %s16, 1
      %s24 = ssub.s32 %s16, %s23
      %p25 = scmp.eq.s32.totalorder %s24, 0
      %s27 = sadd.s32 %s26, 1
      %s28 = scalar_select %p25, %s26, %s27
      %p31 = pneg %p25
      %p32 = scmp.eq.s32.totalorder %s16, 3
      %p33 = por %p31, %p32
      %p34 = scmp.ne.s32.totalorder %s26, %s29
      %p35 = scmp.eq.s32.totalorder %s16, 0
      %p36 = por %p34, %p35
      %p37 = scmp.ne.s32.totalorder %s26, %s29
      %p38 = scmp.eq.s32.totalorder %s21, 3
      %p39 = por %p37, %p38
      %p40 = scmp.ne.s32.totalorder %s29, %s30
      %p41 = scmp.eq.s32.totalorder %s21, 0
      %p42 = por %p40, %p41
      %p43 = scmp.ne.s32.totalorder %s29, %s30
      %p44 = scmp.eq.s32.totalorder %s22, 3
      %p45 = por %p43, %p44
      %p47 = scmp.ne.s32.totalorder %s30, %s46
      %p48 = scmp.eq.s32.totalorder %s22, 0
      %p49 = por %p47, %p48
      %s51 = sadd.s32 %s50, 1
      %p54 = scmp.eq.s32.totalorder %s16, 3
      %p55 = scmp.ne.s32.totalorder %s50, %s52
      %p56 = scmp.eq.s32.totalorder %s16, 0
      %p57 = por %p55, %p56
      %p58 = scmp.ne.s32.totalorder %s50, %s52
      %p59 = scmp.eq.s32.totalorder %s21, 3
      %p60 = por %p58, %p59
      %p61 = scmp.ne.s32.totalorder %s52, %s53
      %p62 = scmp.eq.s32.totalorder %s21, 0
      %p63 = por %p61, %p62
      %p64 = scmp.ne.s32.totalorder %s52, %s53
      %p65 = scmp.eq.s32.totalorder %s22, 3
      %p66 = por %p64, %p65
      %p68 = scmp.ne.s32.totalorder %s53, %s67
      %p69 = scmp.eq.s32.totalorder %s22, 0
      %p70 = por %p68, %p69
      %s72 = sadd.s32 %s71, 1
      %p75 = scmp.eq.s32.totalorder %s16, 3
      %p76 = scmp.ne.s32.totalorder %s71, %s73
      %p77 = scmp.eq.s32.totalorder %s16, 0
      %p78 = por %p76, %p77
      %p79 = scmp.ne.s32.totalorder %s71, %s73
      %p80 = scmp.eq.s32.totalorder %s21, 3
      %p81 = por %p79, %p80
      %p82 = scmp.ne.s32.totalorder %s73, %s74
      %p83 = scmp.eq.s32.totalorder %s21, 0
      %p84 = por %p82, %p83
      %p85 = scmp.ne.s32.totalorder %s73, %s74
      %p86 = scmp.eq.s32.totalorder %s22, 3
      %p87 = por %p85, %p86
      %p89 = scmp.ne.s32.totalorder %s74, %s88
      %p90 = scmp.eq.s32.totalorder %s22, 0
      %p91 = por %p89, %p90
      %s92 = ssub.s32 %s16, %s23
      %p93 = scmp.eq.s32.totalorder %s92, 0
      %s95 = sadd.s32 %s94, 1
      %s96 = scalar_select %p93, %s94, %s95
      %p99 = pneg %p93
      %p100 = scmp.eq.s32.totalorder %s16, 3
      %p101 = por %p99, %p100
      %p102 = scmp.ne.s32.totalorder %s94, %s97
      %p103 = scmp.eq.s32.totalorder %s16, 0
      %p104 = por %p102, %p103
      %p105 = scmp.ne.s32.totalorder %s94, %s97
      %p106 = scmp.eq.s32.totalorder %s21, 3
      %p107 = por %p105, %p106
      %p108 = scmp.ne.s32.totalorder %s97, %s98
      %p109 = scmp.eq.s32.totalorder %s21, 0
      %p110 = por %p108, %p109
      %p111 = scmp.ne.s32.totalorder %s97, %s98
      %p112 = scmp.eq.s32.totalorder %s22, 3
      %p113 = por %p111, %p112
      %p115 = scmp.ne.s32.totalorder %s98, %s114
      %p116 = scmp.eq.s32.totalorder %s22, 0
      %p117 = por %p115, %p116
      %p118 = scmp.le.s32.totalorder 1, %s16
      %p119 = scmp.lt.s32.totalorder %s16, 5
      %p120 = pnand %p118, %p119
      %p121 = pneg %p120
      // Predicated region
      $region9: #{tpu_custom_call.1} parent=5 // pred_check
        _
      $region10: #{tpu_custom_call.1} parent=5 // pred_check_branch
        %123 = sbr.rel (%p120) target = $region12
      $region11: #{tpu_custom_call.1} parent=5 // pred_region
        %s124 = ssub.s32 %s16, 1
        // Predicated region
        $region13: #{tpu_custom_call.1} parent=11 // pred_check
          %p125 = pneg %p63
        $region14: #{tpu_custom_call.1} parent=11 // pred_check_branch
          %127 = sbr.rel (%p125) target = $region16
        $region15: #{tpu_custom_call.1} parent=11 // pred_region
          %129 = vsyncadd [#allocation6], 0
          %s130 = sshll.u32 %s1, 4
          %s131 = int_to_ptr.hbm [resolvable:$true] %s130
          %s132 = sshll.u32 [#allocation5], 4
          %s133 = int_to_ptr.vmem [resolvable:$true] %s132
          %138 = dma.hbm_to_vmem [thread:$0]  %s131, 256, %s133, [#allocation6], 128, 128, 8
        $region16: #{tpu_custom_call.1} parent=11 // pred_fallthru
          _
        // Predicated region
        $region17: #{tpu_custom_call.1} parent=11 // pred_check
          %p139 = pneg %p84
        $region18: #{tpu_custom_call.1} parent=11 // pred_check_branch
          %141 = sbr.rel (%p139) target = $region20
        $region19: #{tpu_custom_call.1} parent=11 // pred_region
          %143 = vsyncadd [#allocation6], 0
          %s144 = sshll.u32 %s2, 4
          %s145 = int_to_ptr.hbm [resolvable:$true] %s144
          %s146 = sshll.u32 [#allocation7], 4
          %s147 = int_to_ptr.vmem [resolvable:$true] %s146
          %152 = dma.hbm_to_vmem [thread:$0]  %s145, 256, %s147, [#allocation6], 128, 128, 8
        $region20: #{tpu_custom_call.1} parent=11 // pred_fallthru
          _
      $region12: #{tpu_custom_call.1} parent=5 // pred_fallthru
        _
      %p153 = scmp.lt.s32.totalorder %s16, 4
      // Predicated region
      $region21: #{tpu_custom_call.1} parent=5 // pred_check
        %p154 = pneg %p153
      $region22: #{tpu_custom_call.1} parent=5 // pred_check_branch
        %156 = sbr.rel (%p154) target = $region24
      $region23: #{tpu_custom_call.1} parent=5 // pred_region
        // Predicated region
        $region25: #{tpu_custom_call.1} parent=23 // pred_check
          %p157 = pneg %p36
        $region26: #{tpu_custom_call.1} parent=23 // pred_check_branch
          %159 = sbr.rel (%p157) target = $region28
        $region27: #{tpu_custom_call.1} parent=23 // pred_region
          %s160 = sand.u32 %s26, 1
          %s161 = scalar_lea.sflag [#allocation3], %s160
          %s162 = sand.u32 %s26, 1
          %s163 = smul.addr %s162, 32
          %s164 = scalar_lea.vmem [#allocation2], %s163
          %s165 = smul.u32 2, %s16
          %167 = vsyncadd %s161, 0
          %s168 = smul.addr %s165, 2
          %s169 = smul.addr %s168, 8
          %s170 = scalar_lea.hbm %s0, %s169
          %s171 = sshll.u32 %s170, 4
          %s172 = int_to_ptr.hbm [resolvable:$true] %s171
          %s173 = sshll.u32 %s164, 4
          %s174 = int_to_ptr.vmem [resolvable:$true] %s173
          %179 = dma.hbm_to_vmem [thread:$0]  %s172, 512, %s174, %s161, 128, 128, 8
        $region28: #{tpu_custom_call.1} parent=23 // pred_fallthru
          _
      $region24: #{tpu_custom_call.1} parent=5 // pred_fallthru
        _
      %p180 = scmp.le.s32.totalorder 1, %s16
      %p181 = scmp.lt.s32.totalorder %s16, 5
      %p182 = pnand %p180, %p181
      %p183 = pneg %p182
      // Predicated region
      $region29: #{tpu_custom_call.1} parent=5 // pred_check
        _
      $region30: #{tpu_custom_call.1} parent=5 // pred_check_branch
        %185 = sbr.rel (%p182) target = $region32
      $region31: #{tpu_custom_call.1} parent=5 // pred_region
        %s186 = ssub.s32 %s16, 1
        %s187 = sand.u32 %s29, 1
        %s188 = scalar_lea.sflag [#allocation3], %s187
        %s189 = sand.u32 %s29, 1
        %s190 = smul.addr %s189, 32
        %s191 = scalar_lea.vmem [#allocation2], %s190
        // Predicated region
        $region33: #{tpu_custom_call.1} parent=31 // pred_check
          %p192 = pneg %p42
        $region34: #{tpu_custom_call.1} parent=31 // pred_check_branch
          %194 = sbr.rel (%p192) target = $region36
        $region35: #{tpu_custom_call.1} parent=31 // pred_region
          %196 = dma.done %s188, 512
        $region36: #{tpu_custom_call.1} parent=31 // pred_fallthru
          _
        // Predicated region
        $region37: #{tpu_custom_call.1} parent=31 // pred_check
          %p197 = pneg %p63
        $region38: #{tpu_custom_call.1} parent=31 // pred_check_branch
          %199 = sbr.rel (%p197) target = $region40
        $region39: #{tpu_custom_call.1} parent=31 // pred_region
          %201 = dma.done [#allocation6], 256
        $region40: #{tpu_custom_call.1} parent=31 // pred_fallthru
          _
        // Predicated region
        $region41: #{tpu_custom_call.1} parent=31 // pred_check
          %p202 = pneg %p84
        $region42: #{tpu_custom_call.1} parent=31 // pred_check_branch
          %204 = sbr.rel (%p202) target = $region44
        $region43: #{tpu_custom_call.1} parent=31 // pred_region
          %206 = dma.done [#allocation6], 256
        $region44: #{tpu_custom_call.1} parent=31 // pred_fallthru
          _
        %s207 = sand.u32 %s29, 1
        %s208 = scalar_lea.sflag [#allocation3], %s207
        %s209 = sand.u32 %s29, 1
        %s210 = smul.addr %s209, 32
        %s211 = scalar_lea.vmem [#allocation2], %s210
        %p212 = pneg %p42
        %p213 = pneg %p39
        %p214 = pneg %p63
        %p215 = pneg %p60
        %p216 = pneg %p84
        %p217 = pneg %p81
        %p218 = pneg %p110
        %p219 = pneg %p107
        %s220 = sand.u32 %s97, 1
        %s221 = scalar_lea.sflag [#allocation4], %s220
        %s222 = sand.u32 %s97, 1
        %s223 = smul.addr %s222, 32
        %s224 = scalar_lea.vmem [#allocation8], %s223
        %s225 = smul.u32 2, %s21
        %s226 = smul.u32 2, %s21
        %v227 = vld [vmem:[%s191] sm:$0xff]
        %v228 = vld [vmem:[%s191 + $0x8] sm:$0xff]
        %v229 = vld [vmem:[%s191 + $0x10] sm:$0xff]
        %v230 = vld [vmem:[%s191 + $0x18] sm:$0xff]
        %v231 = vld [vmem:[#allocation5] sm:$0xff]
        %v232 = vld [vmem:[#allocation5 + $0x8] sm:$0xff]
        %vm233 = vcmask 130048
        %v235 = vsel %vm233, %v227, 0
        %v238 = vsel %vm233, %v228, 0
        %v241 = vsel %vm233, %v229, 0
        %v244 = vsel %vm233, %v230, 0
        %246 = vmatpush.msra.mxu0 0.0
        %247 = vmatpush.msra.mxu0 0.0
        %248 = vmatpush.msra.mxu0 0.0
        %249 = vmatpush.msra.mxu0 0.0
        %250 = vmatpush.msra.mxu0 0.0
        %251 = vmatpush.msra.mxu0 0.0
        %252 = vmatpush.msra.mxu0 0.0
        %253 = vmatpush.msra.mxu0 0.0
        %254 = vmatpush.msra.mxu0 0.0
        %255 = vmatpush.msra.mxu0 0.0
        %256 = vmatpush.msra.mxu0 0.0
        %257 = vmatpush.msra.mxu0 0.0
        %258 = vmatpush.msra.mxu0 0.0
        %259 = vmatpush.msra.mxu0 0.0
        %260 = vmatpush.msra.mxu0 %v232
        %261 = vmatpush.msra.mxu0 %v231
        %262 = vmatmul.f32.gmra.mxu0 %v235
        %v263 = vpop.f32.mrf.mxu0
        %v264 = vadd.f32 0.0, %v263
        %265 = vmatmul.f32.gmra.mxu0 %v238
        %v266 = vpop.f32.mrf.mxu0
        %v267 = vadd.f32 0.0, %v266
        %268 = vmatmul.f32.gmra.mxu0 %v241
        %v269 = vpop.f32.mrf.mxu0
        %v270 = vadd.f32 0.0, %v269
        %271 = vmatmul.f32.gmra.mxu0 %v244
        %v272 = vpop.f32.mrf.mxu0
        %v273 = vadd.f32 0.0, %v272
        %274 = vdwg.mxu0
        %v275 = vld [vmem:[#allocation7] sm:$0xff]
        %v276 = vld [vmem:[#allocation7 + $0x8] sm:$0xff]
        %v278 = vsel %vm233, %v275, 0
        %v281 = vsel %vm233, %v276, 0
        %283 = vmatpush.msra.mxu0 0.0
        %284 = vmatpush.msra.mxu0 0.0
        %285 = vmatpush.msra.mxu0 0.0
        %286 = vmatpush.msra.mxu0 0.0
        %287 = vmatpush.msra.mxu0 0.0
        %288 = vmatpush.msra.mxu0 0.0
        %289 = vmatpush.msra.mxu0 0.0
        %290 = vmatpush.msra.mxu0 0.0
        %291 = vmatpush.msra.mxu0 0.0
        %292 = vmatpush.msra.mxu0 0.0
        %293 = vmatpush.msra.mxu0 0.0
        %294 = vmatpush.msra.mxu0 0.0
        %295 = vmatpush.msra.mxu0 0.0
        %296 = vmatpush.msra.mxu0 0.0
        %297 = vmatpush.msra.mxu0 %v267
        %298 = vmatpush.msra.mxu0 %v264
        %299 = vmatmul.f32.gmra.mxu0 %v278
        %v300 = vpop.f32.mrf.mxu0
        %v301 = vadd.f32 0.0, %v300
        %302 = vmatmul.f32.gmra.mxu0 %v281
        %v303 = vpop.f32.mrf.mxu0
        %v304 = vadd.f32 0.0, %v303
        %305 = vdwg.mxu0
        %306 = vmatpush.msra.mxu0 0.0
        %307 = vmatpush.msra.mxu0 0.0
        %308 = vmatpush.msra.mxu0 0.0
        %309 = vmatpush.msra.mxu0 0.0
        %310 = vmatpush.msra.mxu0 0.0
        %311 = vmatpush.msra.mxu0 0.0
        %312 = vmatpush.msra.mxu0 0.0
        %313 = vmatpush.msra.mxu0 0.0
        %314 = vmatpush.msra.mxu0 0.0
        %315 = vmatpush.msra.mxu0 0.0
        %316 = vmatpush.msra.mxu0 0.0
        %317 = vmatpush.msra.mxu0 0.0
        %318 = vmatpush.msra.mxu0 0.0
        %319 = vmatpush.msra.mxu0 0.0
        %320 = vmatpush.msra.mxu0 %v273
        %321 = vmatpush.msra.mxu0 %v270
        %322 = vmatmul.f32.gmra.mxu0 %v278
        %v323 = vpop.f32.mrf.mxu0
        %v324 = vadd.f32 0.0, %v323
        %325 = vmatmul.f32.gmra.mxu0 %v281
        %v326 = vpop.f32.mrf.mxu0
        %v327 = vadd.f32 0.0, %v326
        %328 = vdwg.mxu0
        %329 = vst.msk [vmem:[%s224] sm:$0xff] %vm233, %v301
        %330 = vst.msk [vmem:[%s224 + $0x8] sm:$0xff] %vm233, %v304
        %331 = vst.msk [vmem:[%s224 + $0x10] sm:$0xff] %vm233, %v324
        %332 = vst.msk [vmem:[%s224 + $0x18] sm:$0xff] %vm233, %v327
        %s333 = sand.u32 %s97, 1
        %s334 = scalar_lea.sflag [#allocation4], %s333
        %s335 = sand.u32 %s97, 1
        %s336 = smul.addr %s335, 32
        %s337 = scalar_lea.vmem [#allocation8], %s336
        // Predicated region
        $region45: #{tpu_custom_call.1} parent=31 // pred_check
          %p338 = pneg %p107
        $region46: #{tpu_custom_call.1} parent=31 // pred_check_branch
          %340 = sbr.rel (%p338) target = $region48
        $region47: #{tpu_custom_call.1} parent=31 // pred_region
          %s341 = smul.u32 2, %s21
          %343 = vsyncadd %s334, 0
          %s344 = smul.addr %s341, 2
          %s345 = smul.addr %s344, 8
          %s346 = scalar_lea.hbm %s3, %s345
          %s347 = sshll.u32 %s337, 4
          %s348 = int_to_ptr.vmem [resolvable:$true] %s347
          %s349 = sshll.u32 %s346, 4
          %s350 = int_to_ptr.hbm [resolvable:$true] %s349
          %355 = dma.vmem_to_hbm [thread:$0]  %s348, 512, %s350, %s334, 128, 128, 8
        $region48: #{tpu_custom_call.1} parent=31 // pred_fallthru
          _
      $region32: #{tpu_custom_call.1} parent=5 // pred_fallthru
        _
      %p356 = scmp.le.s32.totalorder 2, %s16
      // Predicated region
      $region49: #{tpu_custom_call.1} parent=5 // pred_check
        %p357 = pneg %p356
      $region50: #{tpu_custom_call.1} parent=5 // pred_check_branch
        %359 = sbr.rel (%p357) target = $region52
      $region51: #{tpu_custom_call.1} parent=5 // pred_region
        %s360 = ssub.s32 %s16, 2
        // Predicated region
        $region53: #{tpu_custom_call.1} parent=51 // pred_check
          %p361 = pneg %p113
        $region54: #{tpu_custom_call.1} parent=51 // pred_check_branch
          %363 = sbr.rel (%p361) target = $region56
        $region55: #{tpu_custom_call.1} parent=51 // pred_region
          %s364 = sand.u32 %s98, 1
          %s365 = scalar_lea.sflag [#allocation4], %s364
          %s366 = sand.u32 %s98, 1
          %s367 = smul.addr %s366, 32
          %s368 = scalar_lea.vmem [#allocation8], %s367
          %370 = dma.done %s365, 512
        $region56: #{tpu_custom_call.1} parent=51 // pred_fallthru
          _
      $region52: #{tpu_custom_call.1} parent=5 // pred_fallthru
        _
    $region6: #{tpu_custom_call.1} parent=1 // loop_footer
      %s20 = sadd.s32 1, %s16
    $region7: #{tpu_custom_call.1} parent=1 // loop_footer_branch
      %15 = sbr.rel target = $region3
    $region8: #{tpu_custom_call.1} parent=1 // loop_exit
      _
    %371 = vsyncpa [#allocation3], 1
    %s372 = scalar_lea.sflag [#allocation3], 1
    %373 = vsyncpa %s372, 1
    %374 = vsyncpa [#allocation6], 1
    %375 = vsyncpa [#allocation4], 1
    %s376 = scalar_lea.sflag [#allocation4], 1
    %377 = vsyncpa %s376, 1

</llo_original>
